<compile_context>
chip_gen: v7x
topology: tpu7x:2x2x1
jax: 0.10.0
libtpu: 0.0.40
codegen_flags: <defaults>
</compile_context>

<pallas_src>
import functools

import jax
import jax.numpy as jnp
from jax import lax
from jax.experimental import pallas as pl
from jax.experimental.pallas import tpu as pltpu

_BN_EPS = 1e-5
_NEG_BIG = -3.4e38  # stands in for -inf in the max-pool halo


def _recip(d):
    # EUP approximate reciprocal + one Newton-Raphson step -> ~f32 accuracy,
    # keeps the divide sequence off the (bottleneck) VALU slot.
    r = pl.reciprocal(d, approx=True)
    return r * (2.0 - d * r)


def _erf_approx(x):
    # Abramowitz & Stegun 7.1.26, max abs err ~1.5e-7 (f32-accurate).
    # TODO(synk): torch's nn.GELU() uses exact erf; lax.erf may not have a
    # Mosaic lowering rule, so we use this polynomial approximation instead.
    p = 0.3275911
    a1, a2, a3, a4, a5 = (0.254829592, -0.284496736, 1.421413741,
                          -1.453152027, 1.061405429)
    ax = jnp.abs(x)
    t = _recip(1.0 + p * ax)
    poly = ((((a5 * t + a4) * t + a3) * t + a2) * t + a1) * t
    r = 1.0 - poly * jnp.exp(-ax * ax)
    return jnp.where(x < 0.0, -r, r)


def _gelu(x):
    return 0.5 * x * (1.0 + _erf_approx(x * 0.7071067811865476))


def _softmax_lane(z):
    # softmax over the flattened spatial (lane) axis, per (batch, channel) row.
    zmax = jnp.max(z, axis=-1, keepdims=True)
    e = jnp.exp(z - zmax)
    denom = jnp.sum(e, axis=-1, keepdims=True)        # (rows, 1)
    return e * _recip(denom)                          # slab multiply, not divide


def _spatical_kernel(x_ref, w1_ref, b1_ref, wd_ref, bd_ref,
                     w2m_ref, b2m_ref, w2a_ref, b2a_ref, o_ref,
                     *, height, width, bt, c1):
    g1 = x_ref.shape[1]
    hw = x_ref.shape[3]
    c = 2 * c1

    # ---- dwconv1: grouped 1x1 conv (+ folded eval-BN) + GELU
    # rows are (batch_local, out_channel j), b-major -> (bt*c1, hw)
    acc = x_ref[0, 0] * w1_ref[0]
    for g in range(1, g1):
        acc = acc + x_ref[0, g] * w1_ref[g]
    y1 = _gelu(acc + b1_ref[...])                                   # (bt*c1, hw)

    # ---- dwconv: 1x1 conv groups=c1 (out channel k uses y1 channel k // 2)
    # Channel interleave built from static row slices (small C), then one
    # dense (bt*c, hw) GELU slab; x_ is consumed directly by the residual fuse.
    y1_rep = jnp.concatenate(
        [y1[b * c1 + k // 2: b * c1 + k // 2 + 1, :]
         for b in range(bt) for k in range(c)], axis=0)             # (bt*c, hw)
    x_ = _gelu(wd_ref[...] * y1_rep + bd_ref[...])                  # (bt*c, hw)

    # ---- separable 3x3 / stride 1 / pad 1 max- & avg-pool of y1 on the
    # flattened lane axis.  Horizontal neighbours = lane roll by +/-1,
    # vertical = roll by +/-W; wrapped values are excluded by the edge masks.
    # Rows are independent spatial maps so the per-lane masks are shared.
    # (AvgPool2d default count_include_pad=True => divide by 9 everywhere.)
    idx = lax.broadcasted_iota(jnp.int32, (1, hw), 1)
    col = idx % width
    lvalid = col > 0                         # has a left  neighbour
    rvalid = col < (width - 1)               # has a right neighbour
    tvalid = idx >= width                    # has an up   neighbour (row > 0)
    bvalid = idx < (height - 1) * width      # has a down  neighbour
    lmf = lvalid.astype(jnp.float32)
    rmf = rvalid.astype(jnp.float32)
    tmf = tvalid.astype(jnp.float32)
    bmf = bvalid.astype(jnp.float32)

    # horizontal 3-tap pass (rolled tensors shared by max & sum paths)
    rl = pltpu.roll(y1, 1, axis=1)           # value at (r, c-1)
    rr = pltpu.roll(y1, hw - 1, axis=1)      # value at (r, c+1)
    h_max = jnp.maximum(y1, jnp.maximum(jnp.where(lvalid, rl, _NEG_BIG),
                                        jnp.where(rvalid, rr, _NEG_BIG)))
    h_sum = y1 + rl * lmf + rr * rmf

    # vertical 3-tap pass
    mu = pltpu.roll(h_max, width, axis=1)        # row r-1
    md = pltpu.roll(h_max, hw - width, axis=1)   # row r+1
    mx = jnp.maximum(h_max, jnp.maximum(jnp.where(tvalid, mu, _NEG_BIG),
                                        jnp.where(bvalid, md, _NEG_BIG)))
    su = pltpu.roll(h_sum, width, axis=1)
    sd = pltpu.roll(h_sum, hw - width, axis=1)
    avg = (h_sum + su * tmf + sd * bmf) * (1.0 / 9.0)

    # ---- dwconv2 (depthwise 1x1 + BN + GELU) computed per half (no concat),
    # softmax over spatial, fuse + residual; halves written straight to o_ref.
    z_m = _gelu(w2m_ref[...] * mx + b2m_ref[...])       # channels [0, c1)
    z_a = _gelu(w2a_ref[...] * avg + b2a_ref[...])      # channels [c1, c)
    p_m = _softmax_lane(z_m)                            # (bt*c1, hw)
    p_a = _softmax_lane(z_a)

    for b in range(bt):
        o_ref[0, b * c: b * c + c1, :] = (
            x_[b * c: b * c + c1, :] * (1.0 + p_m[b * c1:(b + 1) * c1, :]))
        o_ref[0, b * c + c1:(b + 1) * c, :] = (
            x_[b * c + c1:(b + 1) * c, :] * (1.0 + p_a[b * c1:(b + 1) * c1, :]))


def _fold_bn(w, bias, gamma, beta, mean, var, eps=_BN_EPS):
    """Fold eval-mode BatchNorm into a conv's weight/bias (per out-channel)."""
    a = gamma / jnp.sqrt(var + eps)
    w_eff = w * a.reshape((-1,) + (1,) * (w.ndim - 1))
    b_eff = a * (bias - mean) + beta
    return w_eff, b_eff


def _pick_batch_tile(b, c1, g1, hw, budget_bytes=6 << 20):
    """Largest divisor of b whose per-step f32 working set fits the budget."""
    c = 2 * c1
    best = 1
    for bt in range(1, b + 1):
        if b % bt:
            continue
        # rough working set: double-buffered x/out tiles + live intermediates
        # (y1, rep, x_, pooled slabs, softmax halves), all f32.
        approx = 4 * hw * bt * (2 * g1 * c1 + 2 * c + 6 * c1 + 3 * c)
        if approx <= budget_bytes:
            best = bt
    return best


def spatical_forward(x, params):
    b, cin, h, w = x.shape
    c1, g1 = params["w1"].shape
    assert cin == c1 * g1, "in_dim must be divisible by out_dim // 2"
    c = 2 * c1
    hw = h * w

    bt = _pick_batch_tile(b, c1, g1, hw)
    nb = b // bt

    w1e, b1e = _fold_bn(params["w1"], params["b1"], params["gamma1"],
                        params["beta1"], params["mean1"], params["var1"])
    wde, bde = _fold_bn(params["wd"], params["bd"], params["gammad"],
                        params["betad"], params["meand"], params["vard"])
    w2e, b2e = _fold_bn(params["w2"], params["b2"], params["gamma2"],
                        params["beta2"], params["mean2"], params["var2"])

    # Lane-dense, batch-packed input layout: (nb, g1, bt*c1, H*W); within a
    # batch tile, rows are (batch_local, channel) b-major so bt*c1 sublanes
    # are dense.  The transpose happens once in XLA, outside the kernel.
    # TODO(synk): bf16 HBM I/O would halve traffic if the caller tolerates it.
    x2 = (x.astype(jnp.float32)
           .reshape(nb, bt, c1, g1, hw)
           .transpose(0, 3, 1, 2, 4)
           .reshape(nb, g1, bt * c1, hw))

    # Per-row params as small 2-D blocks, tiled across the batch-packed rows
    # (broadcast along lanes in-kernel).
    def tile_rows(v):
        return jnp.tile(v.reshape(1, -1), (bt, 1)).reshape(-1, 1).astype(jnp.float32)

    w1k = (jnp.tile(jnp.transpose(w1e)[:, None, :], (1, bt, 1))
              .reshape(g1, bt * c1, 1).astype(jnp.float32))
    b1k = tile_rows(b1e)
    wdk = tile_rows(wde)
    bdk = tile_rows(bde)
    w2m = tile_rows(w2e[:c1])   # max-half of dwconv2
    b2m = tile_rows(b2e[:c1])
    w2a = tile_rows(w2e[c1:])   # avg-half of dwconv2
    b2a = tile_rows(b2e[c1:])

    grid_spec = pltpu.PrefetchScalarGridSpec(
        num_scalar_prefetch=0,
        grid=(nb,),
        in_specs=[
            pl.BlockSpec((1, g1, bt * c1, hw), lambda i: (i, 0, 0, 0)),
            pl.BlockSpec((g1, bt * c1, 1), lambda i: (0, 0, 0)),
            pl.BlockSpec((bt * c1, 1), lambda i: (0, 0)),
            pl.BlockSpec((bt * c, 1), lambda i: (0, 0)),
            pl.BlockSpec((bt * c, 1), lambda i: (0, 0)),
            pl.BlockSpec((bt * c1, 1), lambda i: (0, 0)),
            pl.BlockSpec((bt * c1, 1), lambda i: (0, 0)),
            pl.BlockSpec((bt * c1, 1), lambda i: (0, 0)),
            pl.BlockSpec((bt * c1, 1), lambda i: (0, 0)),
        ],
        out_specs=pl.BlockSpec((1, bt * c, hw), lambda i: (i, 0, 0)),
    )
    out = pl.pallas_call(
        functools.partial(_spatical_kernel, height=h, width=w, bt=bt, c1=c1),
        out_shape=jax.ShapeDtypeStruct((nb, bt * c, hw), jnp.float32),
        grid_spec=grid_spec,
        compiler_params=pltpu.CompilerParams(
            dimension_semantics=("parallel",)),
    )(x2, w1k, b1k, wdk, bdk, w2m, b2m, w2a, b2a)
    # rows are (tile, batch_local, channel) -> plain reshape restores (B, C, H, W)
    return out.reshape(b, c, h, w)


def init_params(key, in_dim, out_dim):
    """Deterministic synthetic parameters matching Spatical.__init__ shapes."""
    c1 = out_dim // 2
    c = out_dim
    g1 = in_dim // c1
    ks = jax.random.split(key, 6)
    ones = lambda n: jnp.ones((n,), jnp.float32)
    zeros = lambda n: jnp.zeros((n,), jnp.float32)
    return {
        # 1x1 grouped-conv weights/biases (stored without trailing 1x1 dims)
        "w1": jax.random.normal(ks[0], (c1, g1), jnp.float32) * 0.5,
        "b1": jax.random.normal(ks[1], (c1,), jnp.float32) * 0.1,
        "wd": jax.random.normal(ks[2], (c,), jnp.float32) * 0.5,
        "bd": jax.random.normal(ks[3], (c,), jnp.float32) * 0.1,
        "w2": jax.random.normal(ks[4], (c,), jnp.float32) * 0.5,
        "b2": jax.random.normal(ks[5], (c,), jnp.float32) * 0.1,
        # eval-mode BatchNorm affine + running stats (PyTorch defaults)
        "gamma1": ones(c1), "beta1": zeros(c1), "mean1": zeros(c1), "var1": ones(c1),
        "gammad": ones(c), "betad": zeros(c), "meand": zeros(c), "vard": ones(c),
        "gamma2": ones(c), "beta2": zeros(c), "mean2": zeros(c), "var2": ones(c),
    }


def _ref_forward(x, params):
    """Plain-JAX reference (eval-mode BN) for self-checking the kernel."""
    b, cin, h, w = x.shape
    c1, g1 = params["w1"].shape
    c = 2 * c1
    gelu = lambda t: jax.nn.gelu(t, approximate=False)

    w1e, b1e = _fold_bn(params["w1"], params["b1"], params["gamma1"],
                        params["beta1"], params["mean1"], params["var1"])
    wde, bde = _fold_bn(params["wd"], params["bd"], params["gammad"],
                        params["betad"], params["meand"], params["vard"])
    w2e, b2e = _fold_bn(params["w2"], params["b2"], params["gamma2"],
                        params["beta2"], params["mean2"], params["var2"])

    xg = x.reshape(b, c1, g1, h, w)
    y1 = gelu(jnp.einsum("bcghw,cg->bchw", xg, w1e) + b1e[None, :, None, None])
    x_ = gelu(wde[None, :, None, None] * jnp.repeat(y1, 2, axis=1)
              + bde[None, :, None, None])

    pad_m = jnp.pad(y1, ((0, 0), (0, 0), (1, 1), (1, 1)),
                    constant_values=-jnp.inf)
    pad_s = jnp.pad(y1, ((0, 0), (0, 0), (1, 1), (1, 1)))
    windows_m = [pad_m[:, :, i:i + h, j:j + w] for i in range(3) for j in range(3)]
    windows_s = [pad_s[:, :, i:i + h, j:j + w] for i in range(3) for j in range(3)]
    mx = jnp.max(jnp.stack(windows_m), axis=0)
    avg = sum(windows_s) / 9.0

    cat = jnp.concatenate([mx, avg], axis=1)
    z = gelu(w2e[None, :, None, None] * cat + b2e[None, :, None, None])
    p = jax.nn.softmax(z.reshape(b, c, h * w), axis=-1).reshape(b, c, h, w)
    return p * x_ + x_


if __name__ == "__main__":
    key = jax.random.PRNGKey(0)
    kx, kp = jax.random.split(key)

    in_dim, out_dim = 4, 8
    B, H, W = 2, 16, 16

    x = jax.random.normal(kx, (B, in_dim, H, W), jnp.float32)
    params = init_params(kp, in_dim, out_dim)

    out = spatical_forward(x, params)
    out = jax.block_until_ready(out)

    assert out.shape == (B, out_dim, H, W)
    ref = jax.block_until_ready(_ref_forward(x, params))
    assert jnp.allclose(out, ref, atol=5e-4, rtol=5e-4), (
        float(jnp.max(jnp.abs(out - ref))))
    print("KERNEL_OK")
</pallas_src>

<mosaic_0001>
module attributes {stable_mosaic.version = 11 : i64} {
  func.func @_spatical_kernel(%arg0: i32, %arg1: memref<1x1x8x256xf32, #tpu.memory_space<vmem>>, %arg2: memref<1x8x1xf32, #tpu.memory_space<vmem>>, %arg3: memref<8x1xf32, #tpu.memory_space<vmem>>, %arg4: memref<16x1xf32, #tpu.memory_space<vmem>>, %arg5: memref<16x1xf32, #tpu.memory_space<vmem>>, %arg6: memref<8x1xf32, #tpu.memory_space<vmem>>, %arg7: memref<8x1xf32, #tpu.memory_space<vmem>>, %arg8: memref<8x1xf32, #tpu.memory_space<vmem>>, %arg9: memref<8x1xf32, #tpu.memory_space<vmem>>, %arg10: memref<1x16x256xf32, #tpu.memory_space<vmem>>) attributes {dimension_semantics = [#tpu.dimension_semantics<parallel>], iteration_bounds = array<i64: 1>, scalar_prefetch = 0 : i64, scratch_operands = 0 : i64, tpu.core_type = #tpu.core_type<tc>, window_params = [{transform_indices = @transform_0, window_bounds = array<i64: 1, 1, 8, 256>}, {pipeline_mode = #tpu.pipeline_mode<synchronous>, transform_indices = @transform_1, window_bounds = array<i64: 1, 8, 1>}, {pipeline_mode = #tpu.pipeline_mode<synchronous>, transform_indices = @transform_2, window_bounds = array<i64: 8, 1>}, {pipeline_mode = #tpu.pipeline_mode<synchronous>, transform_indices = @transform_3, window_bounds = array<i64: 16, 1>}, {pipeline_mode = #tpu.pipeline_mode<synchronous>, transform_indices = @transform_4, window_bounds = array<i64: 16, 1>}, {pipeline_mode = #tpu.pipeline_mode<synchronous>, transform_indices = @transform_5, window_bounds = array<i64: 8, 1>}, {pipeline_mode = #tpu.pipeline_mode<synchronous>, transform_indices = @transform_6, window_bounds = array<i64: 8, 1>}, {pipeline_mode = #tpu.pipeline_mode<synchronous>, transform_indices = @transform_7, window_bounds = array<i64: 8, 1>}, {pipeline_mode = #tpu.pipeline_mode<synchronous>, transform_indices = @transform_8, window_bounds = array<i64: 8, 1>}, {transform_indices = @transform_9, window_bounds = array<i64: 1, 16, 256>}]} {
    %c0 = arith.constant 0 : index
    %c0_0 = arith.constant 0 : index
    %c0_1 = arith.constant 0 : index
    %c0_2 = arith.constant 0 : index
    %0 = vector.load %arg1[%c0, %c0_0, %c0_1, %c0_2] : memref<1x1x8x256xf32, #tpu.memory_space<vmem>>, vector<1x1x8x256xf32>
    %1 = vector.shape_cast %0 : vector<1x1x8x256xf32> to vector<8x256xf32>
    %c0_3 = arith.constant 0 : index
    %c0_4 = arith.constant 0 : index
    %c0_5 = arith.constant 0 : index
    %2 = vector.load %arg2[%c0_3, %c0_4, %c0_5] : memref<1x8x1xf32, #tpu.memory_space<vmem>>, vector<1x8x1xf32>
    %3 = vector.shape_cast %2 : vector<1x8x1xf32> to vector<8x1xf32>
    %4 = vector.broadcast %3 : vector<8x1xf32> to vector<8x256xf32>
    %5 = arith.mulf %1, %4 : vector<8x256xf32>
    %c0_6 = arith.constant 0 : index
    %c0_7 = arith.constant 0 : index
    %6 = vector.load %arg3[%c0_6, %c0_7] : memref<8x1xf32, #tpu.memory_space<vmem>>, vector<8x1xf32>
    %7 = vector.broadcast %6 : vector<8x1xf32> to vector<8x256xf32>
    %8 = arith.addf %5, %7 : vector<8x256xf32>
    %cst = arith.constant 5.000000e-01 : f32
    %9 = vector.broadcast %cst : f32 to vector<8x256xf32>
    %10 = arith.mulf %9, %8 : vector<8x256xf32>
    %cst_8 = arith.constant 0.707106769 : f32
    %11 = vector.broadcast %cst_8 : f32 to vector<8x256xf32>
    %12 = arith.mulf %8, %11 : vector<8x256xf32>
    %13 = math.absf %12 : vector<8x256xf32>
    %cst_9 = arith.constant 0.327591091 : f32
    %14 = vector.broadcast %cst_9 : f32 to vector<8x256xf32>
    %15 = arith.mulf %14, %13 : vector<8x256xf32>
    %cst_10 = arith.constant 1.000000e+00 : f32
    %16 = vector.broadcast %cst_10 : f32 to vector<8x256xf32>
    %17 = arith.addf %16, %15 : vector<8x256xf32>
    %18 = tpu.reciprocal %17 {approx = true} : vector<8x256xf32> -> vector<8x256xf32>
    %19 = arith.mulf %17, %18 : vector<8x256xf32>
    %cst_11 = arith.constant 2.000000e+00 : f32
    %20 = vector.broadcast %cst_11 : f32 to vector<8x256xf32>
    %21 = arith.subf %20, %19 : vector<8x256xf32>
    %22 = arith.mulf %18, %21 : vector<8x256xf32>
    %cst_12 = arith.constant 1.06140542 : f32
    %23 = vector.broadcast %cst_12 : f32 to vector<8x256xf32>
    %24 = arith.mulf %23, %22 : vector<8x256xf32>
    %cst_13 = arith.constant -1.45315206 : f32
    %25 = vector.broadcast %cst_13 : f32 to vector<8x256xf32>
    %26 = arith.addf %24, %25 : vector<8x256xf32>
    %27 = arith.mulf %26, %22 : vector<8x256xf32>
    %cst_14 = arith.constant 1.42141378 : f32
    %28 = vector.broadcast %cst_14 : f32 to vector<8x256xf32>
    %29 = arith.addf %27, %28 : vector<8x256xf32>
    %30 = arith.mulf %29, %22 : vector<8x256xf32>
    %cst_15 = arith.constant -0.284496725 : f32
    %31 = vector.broadcast %cst_15 : f32 to vector<8x256xf32>
    %32 = arith.addf %30, %31 : vector<8x256xf32>
    %33 = arith.mulf %32, %22 : vector<8x256xf32>
    %cst_16 = arith.constant 0.254829586 : f32
    %34 = vector.broadcast %cst_16 : f32 to vector<8x256xf32>
    %35 = arith.addf %33, %34 : vector<8x256xf32>
    %36 = arith.mulf %35, %22 : vector<8x256xf32>
    %cst_17 = arith.constant 0.000000e+00 : f32
    %37 = vector.broadcast %cst_17 : f32 to vector<8x256xf32>
    %38 = arith.subf %37, %13 : vector<8x256xf32>
    %39 = arith.mulf %38, %13 : vector<8x256xf32>
    %40 = math.exp %39 : vector<8x256xf32>
    %41 = arith.mulf %36, %40 : vector<8x256xf32>
    %cst_18 = arith.constant 1.000000e+00 : f32
    %42 = vector.broadcast %cst_18 : f32 to vector<8x256xf32>
    %43 = arith.subf %42, %41 : vector<8x256xf32>
    %cst_19 = arith.constant 0.000000e+00 : f32
    %44 = vector.broadcast %cst_19 : f32 to vector<8x256xf32>
    %45 = arith.cmpf olt, %12, %44 : vector<8x256xf32>
    %cst_20 = arith.constant 0.000000e+00 : f32
    %46 = vector.broadcast %cst_20 : f32 to vector<8x256xf32>
    %47 = arith.subf %46, %43 : vector<8x256xf32>
    %48 = arith.select %45, %47, %43 : vector<8x256xi1>, vector<8x256xf32>
    %cst_21 = arith.constant 1.000000e+00 : f32
    %49 = vector.broadcast %cst_21 : f32 to vector<8x256xf32>
    %50 = arith.addf %49, %48 : vector<8x256xf32>
    %51 = arith.mulf %10, %50 : vector<8x256xf32>
    %52 = vector.extract_strided_slice %51 {offsets = [0, 0], sizes = [1, 256], strides = [1, 1]} : vector<8x256xf32> to vector<1x256xf32>
    %53 = vector.extract_strided_slice %51 {offsets = [0, 0], sizes = [1, 256], strides = [1, 1]} : vector<8x256xf32> to vector<1x256xf32>
    %54 = vector.extract_strided_slice %51 {offsets = [1, 0], sizes = [1, 256], strides = [1, 1]} : vector<8x256xf32> to vector<1x256xf32>
    %55 = vector.extract_strided_slice %51 {offsets = [1, 0], sizes = [1, 256], strides = [1, 1]} : vector<8x256xf32> to vector<1x256xf32>
    %56 = vector.extract_strided_slice %51 {offsets = [2, 0], sizes = [1, 256], strides = [1, 1]} : vector<8x256xf32> to vector<1x256xf32>
    %57 = vector.extract_strided_slice %51 {offsets = [2, 0], sizes = [1, 256], strides = [1, 1]} : vector<8x256xf32> to vector<1x256xf32>
    %58 = vector.extract_strided_slice %51 {offsets = [3, 0], sizes = [1, 256], strides = [1, 1]} : vector<8x256xf32> to vector<1x256xf32>
    %59 = vector.extract_strided_slice %51 {offsets = [3, 0], sizes = [1, 256], strides = [1, 1]} : vector<8x256xf32> to vector<1x256xf32>
    %60 = vector.extract_strided_slice %51 {offsets = [4, 0], sizes = [1, 256], strides = [1, 1]} : vector<8x256xf32> to vector<1x256xf32>
    %61 = vector.extract_strided_slice %51 {offsets = [4, 0], sizes = [1, 256], strides = [1, 1]} : vector<8x256xf32> to vector<1x256xf32>
    %62 = vector.extract_strided_slice %51 {offsets = [5, 0], sizes = [1, 256], strides = [1, 1]} : vector<8x256xf32> to vector<1x256xf32>
    %63 = vector.extract_strided_slice %51 {offsets = [5, 0], sizes = [1, 256], strides = [1, 1]} : vector<8x256xf32> to vector<1x256xf32>
    %64 = vector.extract_strided_slice %51 {offsets = [6, 0], sizes = [1, 256], strides = [1, 1]} : vector<8x256xf32> to vector<1x256xf32>
    %65 = vector.extract_strided_slice %51 {offsets = [6, 0], sizes = [1, 256], strides = [1, 1]} : vector<8x256xf32> to vector<1x256xf32>
    %66 = vector.extract_strided_slice %51 {offsets = [7, 0], sizes = [1, 256], strides = [1, 1]} : vector<8x256xf32> to vector<1x256xf32>
    %67 = vector.extract_strided_slice %51 {offsets = [7, 0], sizes = [1, 256], strides = [1, 1]} : vector<8x256xf32> to vector<1x256xf32>
    %68 = tpu.concatenate %52, %53, %54, %55, %56, %57, %58, %59, %60, %61, %62, %63, %64, %65, %66, %67 in 0 : vector<1x256xf32>, vector<1x256xf32>, vector<1x256xf32>, vector<1x256xf32>, vector<1x256xf32>, vector<1x256xf32>, vector<1x256xf32>, vector<1x256xf32>, vector<1x256xf32>, vector<1x256xf32>, vector<1x256xf32>, vector<1x256xf32>, vector<1x256xf32>, vector<1x256xf32>, vector<1x256xf32>, vector<1x256xf32> -> vector<16x256xf32>
    %c0_22 = arith.constant 0 : index
    %c0_23 = arith.constant 0 : index
    %69 = vector.load %arg4[%c0_22, %c0_23] : memref<16x1xf32, #tpu.memory_space<vmem>>, vector<16x1xf32>
    %70 = vector.broadcast %69 : vector<16x1xf32> to vector<16x256xf32>
    %71 = arith.mulf %70, %68 : vector<16x256xf32>
    %c0_24 = arith.constant 0 : index
    %c0_25 = arith.constant 0 : index
    %72 = vector.load %arg5[%c0_24, %c0_25] : memref<16x1xf32, #tpu.memory_space<vmem>>, vector<16x1xf32>
    %73 = vector.broadcast %72 : vector<16x1xf32> to vector<16x256xf32>
    %74 = arith.addf %71, %73 : vector<16x256xf32>
    %cst_26 = arith.constant 5.000000e-01 : f32
    %75 = vector.broadcast %cst_26 : f32 to vector<16x256xf32>
    %76 = arith.mulf %75, %74 : vector<16x256xf32>
    %cst_27 = arith.constant 0.707106769 : f32
    %77 = vector.broadcast %cst_27 : f32 to vector<16x256xf32>
    %78 = arith.mulf %74, %77 : vector<16x256xf32>
    %79 = math.absf %78 : vector<16x256xf32>
    %cst_28 = arith.constant 0.327591091 : f32
    %80 = vector.broadcast %cst_28 : f32 to vector<16x256xf32>
    %81 = arith.mulf %80, %79 : vector<16x256xf32>
    %cst_29 = arith.constant 1.000000e+00 : f32
    %82 = vector.broadcast %cst_29 : f32 to vector<16x256xf32>
    %83 = arith.addf %82, %81 : vector<16x256xf32>
    %84 = tpu.reciprocal %83 {approx = true} : vector<16x256xf32> -> vector<16x256xf32>
    %85 = arith.mulf %83, %84 : vector<16x256xf32>
    %cst_30 = arith.constant 2.000000e+00 : f32
    %86 = vector.broadcast %cst_30 : f32 to vector<16x256xf32>
    %87 = arith.subf %86, %85 : vector<16x256xf32>
    %88 = arith.mulf %84, %87 : vector<16x256xf32>
    %cst_31 = arith.constant 1.06140542 : f32
    %89 = vector.broadcast %cst_31 : f32 to vector<16x256xf32>
    %90 = arith.mulf %89, %88 : vector<16x256xf32>
    %cst_32 = arith.constant -1.45315206 : f32
    %91 = vector.broadcast %cst_32 : f32 to vector<16x256xf32>
    %92 = arith.addf %90, %91 : vector<16x256xf32>
    %93 = arith.mulf %92, %88 : vector<16x256xf32>
    %cst_33 = arith.constant 1.42141378 : f32
    %94 = vector.broadcast %cst_33 : f32 to vector<16x256xf32>
    %95 = arith.addf %93, %94 : vector<16x256xf32>
    %96 = arith.mulf %95, %88 : vector<16x256xf32>
    %cst_34 = arith.constant -0.284496725 : f32
    %97 = vector.broadcast %cst_34 : f32 to vector<16x256xf32>
    %98 = arith.addf %96, %97 : vector<16x256xf32>
    %99 = arith.mulf %98, %88 : vector<16x256xf32>
    %cst_35 = arith.constant 0.254829586 : f32
    %100 = vector.broadcast %cst_35 : f32 to vector<16x256xf32>
    %101 = arith.addf %99, %100 : vector<16x256xf32>
    %102 = arith.mulf %101, %88 : vector<16x256xf32>
    %cst_36 = arith.constant 0.000000e+00 : f32
    %103 = vector.broadcast %cst_36 : f32 to vector<16x256xf32>
    %104 = arith.subf %103, %79 : vector<16x256xf32>
    %105 = arith.mulf %104, %79 : vector<16x256xf32>
    %106 = math.exp %105 : vector<16x256xf32>
    %107 = arith.mulf %102, %106 : vector<16x256xf32>
    %cst_37 = arith.constant 1.000000e+00 : f32
    %108 = vector.broadcast %cst_37 : f32 to vector<16x256xf32>
    %109 = arith.subf %108, %107 : vector<16x256xf32>
    %cst_38 = arith.constant 0.000000e+00 : f32
    %110 = vector.broadcast %cst_38 : f32 to vector<16x256xf32>
    %111 = arith.cmpf olt, %78, %110 : vector<16x256xf32>
    %cst_39 = arith.constant 0.000000e+00 : f32
    %112 = vector.broadcast %cst_39 : f32 to vector<16x256xf32>
    %113 = arith.subf %112, %109 : vector<16x256xf32>
    %114 = arith.select %111, %113, %109 : vector<16x256xi1>, vector<16x256xf32>
    %cst_40 = arith.constant 1.000000e+00 : f32
    %115 = vector.broadcast %cst_40 : f32 to vector<16x256xf32>
    %116 = arith.addf %115, %114 : vector<16x256xf32>
    %117 = arith.mulf %76, %116 : vector<16x256xf32>
    %118 = tpu.iota {dimensions = array<i32: 1>} : vector<1x256xi32>
    %c16_i32 = arith.constant 16 : i32
    %c0_i32 = arith.constant 0 : i32
    %119 = arith.cmpi eq, %c16_i32, %c0_i32 : i32
    %c1_i32 = arith.constant 1 : i32
    %120 = arith.select %119, %c1_i32, %c16_i32 : i32
    %121 = vector.broadcast %120 : i32 to vector<1x256xi32>
    %122 = arith.remsi %118, %121 : vector<1x256xi32>
    %c0_i32_41 = arith.constant 0 : i32
    %123 = vector.broadcast %c0_i32_41 : i32 to vector<1x256xi32>
    %124 = arith.cmpi ne, %122, %123 : vector<1x256xi32>
    %c0_i32_42 = arith.constant 0 : i32
    %125 = vector.broadcast %c0_i32_42 : i32 to vector<1x256xi32>
    %126 = arith.cmpi slt, %122, %125 : vector<1x256xi32>
    %c0_i32_43 = arith.constant 0 : i32
    %127 = arith.cmpi slt, %120, %c0_i32_43 : i32
    %128 = vector.broadcast %127 : i1 to vector<1x256xi1>
    %129 = vector.broadcast %128 : vector<1x256xi1> to vector<1x256xi1>
    %130 = arith.xori %126, %129 : vector<1x256xi1>
    %131 = arith.andi %130, %124 : vector<1x256xi1>
    %132 = vector.broadcast %120 : i32 to vector<1x256xi32>
    %133 = arith.addi %122, %132 : vector<1x256xi32>
    %134 = arith.select %131, %133, %122 : vector<1x256xi1>, vector<1x256xi32>
    %c0_i32_44 = arith.constant 0 : i32
    %135 = vector.broadcast %c0_i32_44 : i32 to vector<1x256xi32>
    %136 = arith.cmpi sgt, %134, %135 : vector<1x256xi32>
    %c15_i32 = arith.constant 15 : i32
    %137 = vector.broadcast %c15_i32 : i32 to vector<1x256xi32>
    %138 = arith.cmpi slt, %134, %137 : vector<1x256xi32>
    %c16_i32_45 = arith.constant 16 : i32
    %139 = vector.broadcast %c16_i32_45 : i32 to vector<1x256xi32>
    %140 = arith.cmpi sge, %118, %139 : vector<1x256xi32>
    %c240_i32 = arith.constant 240 : i32
    %141 = vector.broadcast %c240_i32 : i32 to vector<1x256xi32>
    %142 = arith.cmpi slt, %118, %141 : vector<1x256xi32>
    %143 = arith.extui %136 : vector<1x256xi1> to vector<1x256xi32>
    %144 = arith.sitofp %143 : vector<1x256xi32> to vector<1x256xf32>
    %145 = arith.extui %138 : vector<1x256xi1> to vector<1x256xi32>
    %146 = arith.sitofp %145 : vector<1x256xi32> to vector<1x256xf32>
    %147 = arith.extui %140 : vector<1x256xi1> to vector<1x256xi32>
    %148 = arith.sitofp %147 : vector<1x256xi32> to vector<1x256xf32>
    %149 = arith.extui %142 : vector<1x256xi1> to vector<1x256xi32>
    %150 = arith.sitofp %149 : vector<1x256xi32> to vector<1x256xf32>
    %c1_i32_46 = arith.constant 1 : i32
    %151 = tpu.dynamic_rotate %51 by %c1_i32_46 dim 1 : vector<8x256xf32>, i32 -> vector<8x256xf32>
    %c255_i32 = arith.constant 255 : i32
    %152 = tpu.dynamic_rotate %51 by %c255_i32 dim 1 : vector<8x256xf32>, i32 -> vector<8x256xf32>
    %cst_47 = arith.constant -3.400000e+38 : f32
    %153 = vector.shape_cast %136 : vector<1x256xi1> to vector<1x256xi1>
    %154 = vector.broadcast %153 : vector<1x256xi1> to vector<8x256xi1>
    %155 = vector.broadcast %cst_47 : f32 to vector<8x256xf32>
    %156 = arith.select %154, %151, %155 : vector<8x256xi1>, vector<8x256xf32>
    %cst_48 = arith.constant -3.400000e+38 : f32
    %157 = vector.shape_cast %138 : vector<1x256xi1> to vector<1x256xi1>
    %158 = vector.broadcast %157 : vector<1x256xi1> to vector<8x256xi1>
    %159 = vector.broadcast %cst_48 : f32 to vector<8x256xf32>
    %160 = arith.select %158, %152, %159 : vector<8x256xi1>, vector<8x256xf32>
    %161 = arith.maximumf %156, %160 : vector<8x256xf32>
    %162 = arith.maximumf %51, %161 : vector<8x256xf32>
    %163 = vector.broadcast %144 : vector<1x256xf32> to vector<8x256xf32>
    %164 = arith.mulf %151, %163 : vector<8x256xf32>
    %165 = arith.addf %51, %164 : vector<8x256xf32>
    %166 = vector.broadcast %146 : vector<1x256xf32> to vector<8x256xf32>
    %167 = arith.mulf %152, %166 : vector<8x256xf32>
    %168 = arith.addf %165, %167 : vector<8x256xf32>
    %c16_i32_49 = arith.constant 16 : i32
    %169 = tpu.dynamic_rotate %162 by %c16_i32_49 dim 1 : vector<8x256xf32>, i32 -> vector<8x256xf32>
    %c240_i32_50 = arith.constant 240 : i32
    %170 = tpu.dynamic_rotate %162 by %c240_i32_50 dim 1 : vector<8x256xf32>, i32 -> vector<8x256xf32>
    %cst_51 = arith.constant -3.400000e+38 : f32
    %171 = vector.shape_cast %140 : vector<1x256xi1> to vector<1x256xi1>
    %172 = vector.broadcast %171 : vector<1x256xi1> to vector<8x256xi1>
    %173 = vector.broadcast %cst_51 : f32 to vector<8x256xf32>
    %174 = arith.select %172, %169, %173 : vector<8x256xi1>, vector<8x256xf32>
    %cst_52 = arith.constant -3.400000e+38 : f32
    %175 = vector.shape_cast %142 : vector<1x256xi1> to vector<1x256xi1>
    %176 = vector.broadcast %175 : vector<1x256xi1> to vector<8x256xi1>
    %177 = vector.broadcast %cst_52 : f32 to vector<8x256xf32>
    %178 = arith.select %176, %170, %177 : vector<8x256xi1>, vector<8x256xf32>
    %179 = arith.maximumf %174, %178 : vector<8x256xf32>
    %180 = arith.maximumf %162, %179 : vector<8x256xf32>
    %c16_i32_53 = arith.constant 16 : i32
    %181 = tpu.dynamic_rotate %168 by %c16_i32_53 dim 1 : vector<8x256xf32>, i32 -> vector<8x256xf32>
    %c240_i32_54 = arith.constant 240 : i32
    %182 = tpu.dynamic_rotate %168 by %c240_i32_54 dim 1 : vector<8x256xf32>, i32 -> vector<8x256xf32>
    %183 = vector.broadcast %148 : vector<1x256xf32> to vector<8x256xf32>
    %184 = arith.mulf %181, %183 : vector<8x256xf32>
    %185 = arith.addf %168, %184 : vector<8x256xf32>
    %186 = vector.broadcast %150 : vector<1x256xf32> to vector<8x256xf32>
    %187 = arith.mulf %182, %186 : vector<8x256xf32>
    %188 = arith.addf %185, %187 : vector<8x256xf32>
    %cst_55 = arith.constant 0.111111112 : f32
    %189 = vector.broadcast %cst_55 : f32 to vector<8x256xf32>
    %190 = arith.mulf %188, %189 : vector<8x256xf32>
    %c0_56 = arith.constant 0 : index
    %c0_57 = arith.constant 0 : index
    %191 = vector.load %arg6[%c0_56, %c0_57] : memref<8x1xf32, #tpu.memory_space<vmem>>, vector<8x1xf32>
    %192 = vector.broadcast %191 : vector<8x1xf32> to vector<8x256xf32>
    %193 = arith.mulf %192, %180 : vector<8x256xf32>
    %c0_58 = arith.constant 0 : index
    %c0_59 = arith.constant 0 : index
    %194 = vector.load %arg7[%c0_58, %c0_59] : memref<8x1xf32, #tpu.memory_space<vmem>>, vector<8x1xf32>
    %195 = vector.broadcast %194 : vector<8x1xf32> to vector<8x256xf32>
    %196 = arith.addf %193, %195 : vector<8x256xf32>
    %cst_60 = arith.constant 5.000000e-01 : f32
    %197 = vector.broadcast %cst_60 : f32 to vector<8x256xf32>
    %198 = arith.mulf %197, %196 : vector<8x256xf32>
    %cst_61 = arith.constant 0.707106769 : f32
    %199 = vector.broadcast %cst_61 : f32 to vector<8x256xf32>
    %200 = arith.mulf %196, %199 : vector<8x256xf32>
    %201 = math.absf %200 : vector<8x256xf32>
    %cst_62 = arith.constant 0.327591091 : f32
    %202 = vector.broadcast %cst_62 : f32 to vector<8x256xf32>
    %203 = arith.mulf %202, %201 : vector<8x256xf32>
    %cst_63 = arith.constant 1.000000e+00 : f32
    %204 = vector.broadcast %cst_63 : f32 to vector<8x256xf32>
    %205 = arith.addf %204, %203 : vector<8x256xf32>
    %206 = tpu.reciprocal %205 {approx = true} : vector<8x256xf32> -> vector<8x256xf32>
    %207 = arith.mulf %205, %206 : vector<8x256xf32>
    %cst_64 = arith.constant 2.000000e+00 : f32
    %208 = vector.broadcast %cst_64 : f32 to vector<8x256xf32>
    %209 = arith.subf %208, %207 : vector<8x256xf32>
    %210 = arith.mulf %206, %209 : vector<8x256xf32>
    %cst_65 = arith.constant 1.06140542 : f32
    %211 = vector.broadcast %cst_65 : f32 to vector<8x256xf32>
    %212 = arith.mulf %211, %210 : vector<8x256xf32>
    %cst_66 = arith.constant -1.45315206 : f32
    %213 = vector.broadcast %cst_66 : f32 to vector<8x256xf32>
    %214 = arith.addf %212, %213 : vector<8x256xf32>
    %215 = arith.mulf %214, %210 : vector<8x256xf32>
    %cst_67 = arith.constant 1.42141378 : f32
    %216 = vector.broadcast %cst_67 : f32 to vector<8x256xf32>
    %217 = arith.addf %215, %216 : vector<8x256xf32>
    %218 = arith.mulf %217, %210 : vector<8x256xf32>
    %cst_68 = arith.constant -0.284496725 : f32
    %219 = vector.broadcast %cst_68 : f32 to vector<8x256xf32>
    %220 = arith.addf %218, %219 : vector<8x256xf32>
    %221 = arith.mulf %220, %210 : vector<8x256xf32>
    %cst_69 = arith.constant 0.254829586 : f32
    %222 = vector.broadcast %cst_69 : f32 to vector<8x256xf32>
    %223 = arith.addf %221, %222 : vector<8x256xf32>
    %224 = arith.mulf %223, %210 : vector<8x256xf32>
    %cst_70 = arith.constant 0.000000e+00 : f32
    %225 = vector.broadcast %cst_70 : f32 to vector<8x256xf32>
    %226 = arith.subf %225, %201 : vector<8x256xf32>
    %227 = arith.mulf %226, %201 : vector<8x256xf32>
    %228 = math.exp %227 : vector<8x256xf32>
    %229 = arith.mulf %224, %228 : vector<8x256xf32>
    %cst_71 = arith.constant 1.000000e+00 : f32
    %230 = vector.broadcast %cst_71 : f32 to vector<8x256xf32>
    %231 = arith.subf %230, %229 : vector<8x256xf32>
    %cst_72 = arith.constant 0.000000e+00 : f32
    %232 = vector.broadcast %cst_72 : f32 to vector<8x256xf32>
    %233 = arith.cmpf olt, %200, %232 : vector<8x256xf32>
    %cst_73 = arith.constant 0.000000e+00 : f32
    %234 = vector.broadcast %cst_73 : f32 to vector<8x256xf32>
    %235 = arith.subf %234, %231 : vector<8x256xf32>
    %236 = arith.select %233, %235, %231 : vector<8x256xi1>, vector<8x256xf32>
    %cst_74 = arith.constant 1.000000e+00 : f32
    %237 = vector.broadcast %cst_74 : f32 to vector<8x256xf32>
    %238 = arith.addf %237, %236 : vector<8x256xf32>
    %239 = arith.mulf %198, %238 : vector<8x256xf32>
    %c0_75 = arith.constant 0 : index
    %c0_76 = arith.constant 0 : index
    %240 = vector.load %arg8[%c0_75, %c0_76] : memref<8x1xf32, #tpu.memory_space<vmem>>, vector<8x1xf32>
    %241 = vector.broadcast %240 : vector<8x1xf32> to vector<8x256xf32>
    %242 = arith.mulf %241, %190 : vector<8x256xf32>
    %c0_77 = arith.constant 0 : index
    %c0_78 = arith.constant 0 : index
    %243 = vector.load %arg9[%c0_77, %c0_78] : memref<8x1xf32, #tpu.memory_space<vmem>>, vector<8x1xf32>
    %244 = vector.broadcast %243 : vector<8x1xf32> to vector<8x256xf32>
    %245 = arith.addf %242, %244 : vector<8x256xf32>
    %cst_79 = arith.constant 5.000000e-01 : f32
    %246 = vector.broadcast %cst_79 : f32 to vector<8x256xf32>
    %247 = arith.mulf %246, %245 : vector<8x256xf32>
    %cst_80 = arith.constant 0.707106769 : f32
    %248 = vector.broadcast %cst_80 : f32 to vector<8x256xf32>
    %249 = arith.mulf %245, %248 : vector<8x256xf32>
    %250 = math.absf %249 : vector<8x256xf32>
    %cst_81 = arith.constant 0.327591091 : f32
    %251 = vector.broadcast %cst_81 : f32 to vector<8x256xf32>
    %252 = arith.mulf %251, %250 : vector<8x256xf32>
    %cst_82 = arith.constant 1.000000e+00 : f32
    %253 = vector.broadcast %cst_82 : f32 to vector<8x256xf32>
    %254 = arith.addf %253, %252 : vector<8x256xf32>
    %255 = tpu.reciprocal %254 {approx = true} : vector<8x256xf32> -> vector<8x256xf32>
    %256 = arith.mulf %254, %255 : vector<8x256xf32>
    %cst_83 = arith.constant 2.000000e+00 : f32
    %257 = vector.broadcast %cst_83 : f32 to vector<8x256xf32>
    %258 = arith.subf %257, %256 : vector<8x256xf32>
    %259 = arith.mulf %255, %258 : vector<8x256xf32>
    %cst_84 = arith.constant 1.06140542 : f32
    %260 = vector.broadcast %cst_84 : f32 to vector<8x256xf32>
    %261 = arith.mulf %260, %259 : vector<8x256xf32>
    %cst_85 = arith.constant -1.45315206 : f32
    %262 = vector.broadcast %cst_85 : f32 to vector<8x256xf32>
    %263 = arith.addf %261, %262 : vector<8x256xf32>
    %264 = arith.mulf %263, %259 : vector<8x256xf32>
    %cst_86 = arith.constant 1.42141378 : f32
    %265 = vector.broadcast %cst_86 : f32 to vector<8x256xf32>
    %266 = arith.addf %264, %265 : vector<8x256xf32>
    %267 = arith.mulf %266, %259 : vector<8x256xf32>
    %cst_87 = arith.constant -0.284496725 : f32
    %268 = vector.broadcast %cst_87 : f32 to vector<8x256xf32>
    %269 = arith.addf %267, %268 : vector<8x256xf32>
    %270 = arith.mulf %269, %259 : vector<8x256xf32>
    %cst_88 = arith.constant 0.254829586 : f32
    %271 = vector.broadcast %cst_88 : f32 to vector<8x256xf32>
    %272 = arith.addf %270, %271 : vector<8x256xf32>
    %273 = arith.mulf %272, %259 : vector<8x256xf32>
    %cst_89 = arith.constant 0.000000e+00 : f32
    %274 = vector.broadcast %cst_89 : f32 to vector<8x256xf32>
    %275 = arith.subf %274, %250 : vector<8x256xf32>
    %276 = arith.mulf %275, %250 : vector<8x256xf32>
    %277 = math.exp %276 : vector<8x256xf32>
    %278 = arith.mulf %273, %277 : vector<8x256xf32>
    %cst_90 = arith.constant 1.000000e+00 : f32
    %279 = vector.broadcast %cst_90 : f32 to vector<8x256xf32>
    %280 = arith.subf %279, %278 : vector<8x256xf32>
    %cst_91 = arith.constant 0.000000e+00 : f32
    %281 = vector.broadcast %cst_91 : f32 to vector<8x256xf32>
    %282 = arith.cmpf olt, %249, %281 : vector<8x256xf32>
    %cst_92 = arith.constant 0.000000e+00 : f32
    %283 = vector.broadcast %cst_92 : f32 to vector<8x256xf32>
    %284 = arith.subf %283, %280 : vector<8x256xf32>
    %285 = arith.select %282, %284, %280 : vector<8x256xi1>, vector<8x256xf32>
    %cst_93 = arith.constant 1.000000e+00 : f32
    %286 = vector.broadcast %cst_93 : f32 to vector<8x256xf32>
    %287 = arith.addf %286, %285 : vector<8x256xf32>
    %288 = arith.mulf %247, %287 : vector<8x256xf32>
    %cst_94 = arith.constant dense<0xFF800000> : vector<8xf32>
    %289 = vector.multi_reduction <maximumf>, %239, %cst_94 [1] : vector<8x256xf32> to vector<8xf32>
    %290 = vector.shape_cast %289 : vector<8xf32> to vector<8x1xf32>
    %291 = vector.broadcast %290 : vector<8x1xf32> to vector<8x256xf32>
    %292 = arith.subf %239, %291 : vector<8x256xf32>
    %293 = math.exp %292 : vector<8x256xf32>
    %cst_95 = arith.constant dense<0.000000e+00> : vector<8xf32>
    %294 = vector.multi_reduction <add>, %293, %cst_95 [1] : vector<8x256xf32> to vector<8xf32>
    %295 = vector.shape_cast %294 : vector<8xf32> to vector<8x1xf32>
    %296 = tpu.reciprocal %295 {approx = true} : vector<8x1xf32> -> vector<8x1xf32>
    %297 = arith.mulf %295, %296 : vector<8x1xf32>
    %cst_96 = arith.constant 2.000000e+00 : f32
    %298 = vector.broadcast %cst_96 : f32 to vector<8x1xf32>
    %299 = arith.subf %298, %297 : vector<8x1xf32>
    %300 = arith.mulf %296, %299 : vector<8x1xf32>
    %301 = vector.broadcast %300 : vector<8x1xf32> to vector<8x256xf32>
    %302 = arith.mulf %293, %301 : vector<8x256xf32>
    %cst_97 = arith.constant dense<0xFF800000> : vector<8xf32>
    %303 = vector.multi_reduction <maximumf>, %288, %cst_97 [1] : vector<8x256xf32> to vector<8xf32>
    %304 = vector.shape_cast %303 : vector<8xf32> to vector<8x1xf32>
    %305 = vector.broadcast %304 : vector<8x1xf32> to vector<8x256xf32>
    %306 = arith.subf %288, %305 : vector<8x256xf32>
    %307 = math.exp %306 : vector<8x256xf32>
    %cst_98 = arith.constant dense<0.000000e+00> : vector<8xf32>
    %308 = vector.multi_reduction <add>, %307, %cst_98 [1] : vector<8x256xf32> to vector<8xf32>
    %309 = vector.shape_cast %308 : vector<8xf32> to vector<8x1xf32>
    %310 = tpu.reciprocal %309 {approx = true} : vector<8x1xf32> -> vector<8x1xf32>
    %311 = arith.mulf %309, %310 : vector<8x1xf32>
    %cst_99 = arith.constant 2.000000e+00 : f32
    %312 = vector.broadcast %cst_99 : f32 to vector<8x1xf32>
    %313 = arith.subf %312, %311 : vector<8x1xf32>
    %314 = arith.mulf %310, %313 : vector<8x1xf32>
    %315 = vector.broadcast %314 : vector<8x1xf32> to vector<8x256xf32>
    %316 = arith.mulf %307, %315 : vector<8x256xf32>
    %317 = vector.extract_strided_slice %117 {offsets = [0, 0], sizes = [4, 256], strides = [1, 1]} : vector<16x256xf32> to vector<4x256xf32>
    %318 = vector.extract_strided_slice %302 {offsets = [0, 0], sizes = [4, 256], strides = [1, 1]} : vector<8x256xf32> to vector<4x256xf32>
    %cst_100 = arith.constant 1.000000e+00 : f32
    %319 = vector.broadcast %cst_100 : f32 to vector<4x256xf32>
    %320 = arith.addf %319, %318 : vector<4x256xf32>
    %321 = arith.mulf %317, %320 : vector<4x256xf32>
    %c0_101 = arith.constant 0 : index
    %c0_102 = arith.constant 0 : index
    %c0_103 = arith.constant 0 : index
    %322 = vector.load %arg10[%c0_101, %c0_102, %c0_103] : memref<1x16x256xf32, #tpu.memory_space<vmem>>, vector<1x4x256xf32>
    %323 = vector.shape_cast %322 : vector<1x4x256xf32> to vector<4x256xf32>
    %324 = vector.shape_cast %321 : vector<4x256xf32> to vector<1x4x256xf32>
    tpu.vector_store %arg10[%c0_101, %c0_102, %c0_103], %324 {strides = array<i32>} : memref<1x16x256xf32, #tpu.memory_space<vmem>>, vector<1x4x256xf32>,
    %325 = vector.extract_strided_slice %117 {offsets = [4, 0], sizes = [4, 256], strides = [1, 1]} : vector<16x256xf32> to vector<4x256xf32>
    %326 = vector.extract_strided_slice %316 {offsets = [0, 0], sizes = [4, 256], strides = [1, 1]} : vector<8x256xf32> to vector<4x256xf32>
    %cst_104 = arith.constant 1.000000e+00 : f32
    %327 = vector.broadcast %cst_104 : f32 to vector<4x256xf32>
    %328 = arith.addf %327, %326 : vector<4x256xf32>
    %329 = arith.mulf %325, %328 : vector<4x256xf32>
    %c0_105 = arith.constant 0 : index
    %c4 = arith.constant 4 : index
    %c0_106 = arith.constant 0 : index
    %330 = vector.load %arg10[%c0_105, %c4, %c0_106] : memref<1x16x256xf32, #tpu.memory_space<vmem>>, vector<1x4x256xf32>
    %331 = vector.shape_cast %330 : vector<1x4x256xf32> to vector<4x256xf32>
    %332 = vector.shape_cast %329 : vector<4x256xf32> to vector<1x4x256xf32>
    tpu.vector_store %arg10[%c0_105, %c4, %c0_106], %332 {strides = array<i32>} : memref<1x16x256xf32, #tpu.memory_space<vmem>>, vector<1x4x256xf32>,
    %333 = vector.extract_strided_slice %117 {offsets = [8, 0], sizes = [4, 256], strides = [1, 1]} : vector<16x256xf32> to vector<4x256xf32>
    %334 = vector.extract_strided_slice %302 {offsets = [4, 0], sizes = [4, 256], strides = [1, 1]} : vector<8x256xf32> to vector<4x256xf32>
    %cst_107 = arith.constant 1.000000e+00 : f32
    %335 = vector.broadcast %cst_107 : f32 to vector<4x256xf32>
    %336 = arith.addf %335, %334 : vector<4x256xf32>
    %337 = arith.mulf %333, %336 : vector<4x256xf32>
    %c0_108 = arith.constant 0 : index
    %c8 = arith.constant 8 : index
    %c0_109 = arith.constant 0 : index
    %338 = vector.load %arg10[%c0_108, %c8, %c0_109] : memref<1x16x256xf32, #tpu.memory_space<vmem>>, vector<1x4x256xf32>
    %339 = vector.shape_cast %338 : vector<1x4x256xf32> to vector<4x256xf32>
    %340 = vector.shape_cast %337 : vector<4x256xf32> to vector<1x4x256xf32>
    tpu.vector_store %arg10[%c0_108, %c8, %c0_109], %340 {strides = array<i32>} : memref<1x16x256xf32, #tpu.memory_space<vmem>>, vector<1x4x256xf32>,
    %341 = vector.extract_strided_slice %117 {offsets = [12, 0], sizes = [4, 256], strides = [1, 1]} : vector<16x256xf32> to vector<4x256xf32>
    %342 = vector.extract_strided_slice %316 {offsets = [4, 0], sizes = [4, 256], strides = [1, 1]} : vector<8x256xf32> to vector<4x256xf32>
    %cst_110 = arith.constant 1.000000e+00 : f32
    %343 = vector.broadcast %cst_110 : f32 to vector<4x256xf32>
    %344 = arith.addf %343, %342 : vector<4x256xf32>
    %345 = arith.mulf %341, %344 : vector<4x256xf32>
    %c0_111 = arith.constant 0 : index
    %c12 = arith.constant 12 : index
    %c0_112 = arith.constant 0 : index
    %346 = vector.load %arg10[%c0_111, %c12, %c0_112] : memref<1x16x256xf32, #tpu.memory_space<vmem>>, vector<1x4x256xf32>
    %347 = vector.shape_cast %346 : vector<1x4x256xf32> to vector<4x256xf32>
    %348 = vector.shape_cast %345 : vector<4x256xf32> to vector<1x4x256xf32>
    tpu.vector_store %arg10[%c0_111, %c12, %c0_112], %348 {strides = array<i32>} : memref<1x16x256xf32, #tpu.memory_space<vmem>>, vector<1x4x256xf32>,
    return
  }
  func.func @transform_0(%arg0: i32) -> (i32, i32, i32, i32) {
    %c0_i32 = arith.constant 0 : i32
    %c0_i32_0 = arith.constant 0 : i32
    %c0_i32_1 = arith.constant 0 : i32
    %c0_i32_2 = arith.constant 0 : i32
    return %arg0, %c0_i32, %c0_i32_0, %c0_i32_1 : i32, i32, i32, i32
  }
  func.func @transform_1(%arg0: i32) -> (i32, i32, i32) {
    %c0_i32 = arith.constant 0 : i32
    %c0_i32_0 = arith.constant 0 : i32
    %c0_i32_1 = arith.constant 0 : i32
    %c0_i32_2 = arith.constant 0 : i32
    return %c0_i32, %c0_i32_0, %c0_i32_1 : i32, i32, i32
  }
  func.func @transform_2(%arg0: i32) -> (i32, i32) {
    %c0_i32 = arith.constant 0 : i32
    %c0_i32_0 = arith.constant 0 : i32
    %c0_i32_1 = arith.constant 0 : i32
    return %c0_i32, %c0_i32_0 : i32, i32
  }
  func.func @transform_3(%arg0: i32) -> (i32, i32) {
    %c0_i32 = arith.constant 0 : i32
    %c0_i32_0 = arith.constant 0 : i32
    %c0_i32_1 = arith.constant 0 : i32
    return %c0_i32, %c0_i32_0 : i32, i32
  }
  func.func @transform_4(%arg0: i32) -> (i32, i32) {
    %c0_i32 = arith.constant 0 : i32
    %c0_i32_0 = arith.constant 0 : i32
    %c0_i32_1 = arith.constant 0 : i32
    return %c0_i32, %c0_i32_0 : i32, i32
  }
  func.func @transform_5(%arg0: i32) -> (i32, i32) {
    %c0_i32 = arith.constant 0 : i32
    %c0_i32_0 = arith.constant 0 : i32
    %c0_i32_1 = arith.constant 0 : i32
    return %c0_i32, %c0_i32_0 : i32, i32
  }
  func.func @transform_6(%arg0: i32) -> (i32, i32) {
    %c0_i32 = arith.constant 0 : i32
    %c0_i32_0 = arith.constant 0 : i32
    %c0_i32_1 = arith.constant 0 : i32
    return %c0_i32, %c0_i32_0 : i32, i32
  }
  func.func @transform_7(%arg0: i32) -> (i32, i32) {
    %c0_i32 = arith.constant 0 : i32
    %c0_i32_0 = arith.constant 0 : i32
    %c0_i32_1 = arith.constant 0 : i32
    return %c0_i32, %c0_i32_0 : i32, i32
  }
  func.func @transform_8(%arg0: i32) -> (i32, i32) {
    %c0_i32 = arith.constant 0 : i32
    %c0_i32_0 = arith.constant 0 : i32
    %c0_i32_1 = arith.constant 0 : i32
    return %c0_i32, %c0_i32_0 : i32, i32
  }
  func.func @transform_9(%arg0: i32) -> (i32, i32, i32) {
    %c0_i32 = arith.constant 0 : i32
    %c0_i32_0 = arith.constant 0 : i32
    %c0_i32_1 = arith.constant 0 : i32
    return %arg0, %c0_i32, %c0_i32_0 : i32, i32, i32
  }
}

</mosaic_0001>

<llo_original>
// kernel: tpu_custom_call.1
$region0: #{tpu_custom_call.1}
  #allocation0 [shape = 'u32[]', space=smem, size = 0x4, offset = 0x4, fixed_abs, tag = 'smem constant byte address 0x4 - core index']
  #allocation1 [shape = 'u32[144,128]{1,0:T(1,128)}', space=vmem, size = 0x12000, scoped, tag = 'internal scratch']
  %s0 = inlined_call_operand.vmem [shape: f32[1,1,8,256], index: 0, kind: input, shape index: {}]
  %s1 = inlined_call_operand.vmem [shape: f32[1,8,1], index: 1, kind: input, shape index: {}]
  %s2 = inlined_call_operand.vmem [shape: f32[8,1], index: 2, kind: input, shape index: {}]
  %s3 = inlined_call_operand.vmem [shape: f32[16,1], index: 3, kind: input, shape index: {}]
  %s4 = inlined_call_operand.vmem [shape: f32[16,1], index: 4, kind: input, shape index: {}]
  %s5 = inlined_call_operand.vmem [shape: f32[8,1], index: 5, kind: input, shape index: {}]
  %s6 = inlined_call_operand.vmem [shape: f32[8,1], index: 6, kind: input, shape index: {}]
  %s7 = inlined_call_operand.vmem [shape: f32[8,1], index: 7, kind: input, shape index: {}]
  %s8 = inlined_call_operand.vmem [shape: f32[8,1], index: 8, kind: input, shape index: {}]
  %s9 = inlined_call_operand.hbm [shape: f32[1,16,256], index: 9, kind: output, shape index: {}]
  %s10 = sld [smem:[#allocation0]]
  $region46: #{tpu_custom_call.1} parent=0
    _
  %s12 = ssub.s32 1, %s10
  %s13 = scalar_select 0, %s12, %s10
  $region1: #{tpu_custom_call.1} parent=0
    #allocation2 [shape = 'u8[16384]{0}', space=vmem, size = 0x4000, scoped, tag = 'output window, operand 0, single buffered']
    #allocation3 [shape = 's32[1]{0}', space=sflag, size = 0x4, scoped, tag = 'scoped memory for tpu_custom_call.1']
    %14 = vsyncpa [#allocation3], 0
    // Predicated region
    $region2: #{tpu_custom_call.1} parent=1 // pred_check
      _
    $region3: #{tpu_custom_call.1} parent=1 // pred_check_branch
      %16 = sbr.rel (0) target = $region5
    $region4: #{tpu_custom_call.1} parent=1 // pred_region
      _
    $region5: #{tpu_custom_call.1} parent=1 // pred_fallthru
      _
    // Predicated region
    $region6: #{tpu_custom_call.1} parent=1 // pred_check
      _
    $region7: #{tpu_custom_call.1} parent=1 // pred_check_branch
      %18 = sbr.rel (0) target = $region9
    $region8: #{tpu_custom_call.1} parent=1 // pred_region
      _
    $region9: #{tpu_custom_call.1} parent=1 // pred_fallthru
      _
    // Predicated region
    $region10: #{tpu_custom_call.1} parent=1 // pred_check
      _
    $region11: #{tpu_custom_call.1} parent=1 // pred_check_branch
      %20 = sbr.rel (0) target = $region13
    $region12: #{tpu_custom_call.1} parent=1 // pred_region
      _
    $region13: #{tpu_custom_call.1} parent=1 // pred_fallthru
      _
    // Predicated region
    $region14: #{tpu_custom_call.1} parent=1 // pred_check
      _
    $region15: #{tpu_custom_call.1} parent=1 // pred_check_branch
      %22 = sbr.rel (0) target = $region17
    $region16: #{tpu_custom_call.1} parent=1 // pred_region
      _
    $region17: #{tpu_custom_call.1} parent=1 // pred_fallthru
      _
    // Predicated region
    $region18: #{tpu_custom_call.1} parent=1 // pred_check
      _
    $region19: #{tpu_custom_call.1} parent=1 // pred_check_branch
      %24 = sbr.rel (0) target = $region21
    $region20: #{tpu_custom_call.1} parent=1 // pred_region
      _
    $region21: #{tpu_custom_call.1} parent=1 // pred_fallthru
      _
    // Predicated region
    $region22: #{tpu_custom_call.1} parent=1 // pred_check
      _
    $region23: #{tpu_custom_call.1} parent=1 // pred_check_branch
      %26 = sbr.rel (0) target = $region25
    $region24: #{tpu_custom_call.1} parent=1 // pred_region
      _
    $region25: #{tpu_custom_call.1} parent=1 // pred_fallthru
      _
    // Predicated region
    $region26: #{tpu_custom_call.1} parent=1 // pred_check
      _
    $region27: #{tpu_custom_call.1} parent=1 // pred_check_branch
      %28 = sbr.rel (0) target = $region29
    $region28: #{tpu_custom_call.1} parent=1 // pred_region
      _
    $region29: #{tpu_custom_call.1} parent=1 // pred_fallthru
      _
    // Predicated region
    $region30: #{tpu_custom_call.1} parent=1 // pred_check
      _
    $region31: #{tpu_custom_call.1} parent=1 // pred_check_branch
      %30 = sbr.rel (0) target = $region33
    $region32: #{tpu_custom_call.1} parent=1 // pred_region
      _
    $region33: #{tpu_custom_call.1} parent=1 // pred_fallthru
      _
    // Predicated region
    $region34: #{tpu_custom_call.1} parent=1 // pred_check
      _
    $region35: #{tpu_custom_call.1} parent=1 // pred_check_branch
      %32 = sbr.rel (0) target = $region37
    $region36: #{tpu_custom_call.1} parent=1 // pred_region
      _
    $region37: #{tpu_custom_call.1} parent=1 // pred_fallthru
      _
    %v33 = vld [vmem:[%s0] sm:$0xff]
    %v34 = vld [vmem:[%s0 + $0x8] sm:$0xff]
    %v35 = vld [vmem:[%s1] sm:$0xff]
    %37 = vset.pattern.permute.xlu0 0
    %38 = vperm.xlu0 %37, %v35
    %v39 = vpop.permute.xlu0 %38
    %v41 = vmul.f32 %v33, %v39
    %v42 = vmul.f32 %v34, %v39
    %v43 = vld [vmem:[%s2] sm:$0xff]
    %45 = vset.pattern.permute.xlu0 0
    %46 = vperm.xlu0 %45, %v43
    %v47 = vpop.permute.xlu0 %46
    %v49 = vadd.f32 %v41, %v47
    %v50 = vadd.f32 %v42, %v47
    %v51 = vmul.f32 %v49, 0.5
    %v52 = vmul.f32 %v50, 0.5
    %v53 = vmul.f32 %v49, 0.70710677
    %v54 = vmul.f32 %v50, 0.70710677
    %v55 = vand.u32 2147483647, %v53
    %v56 = vand.u32 2147483647, %v54
    %v57 = vmul.f32 %v55, 0.3275911
    %v58 = vmul.f32 %v56, 0.3275911
    %v59 = vadd.f32 %v57, 1.0
    %v60 = vadd.f32 %v58, 1.0
    %v61 = vrcp.pop %v59
    %v62 = vrcp.pop %v60
    %v63 = vmul.f32 %v59, %v61
    %v64 = vmul.f32 %v60, %v62
    %v65 = vsub.f32 2.0, %v63
    %v66 = vsub.f32 2.0, %v64
    %v67 = vmul.f32 %v61, %v65
    %v68 = vmul.f32 %v62, %v66
    %v69 = vmul.f32 %v67, 1.0614054
    %v70 = vmul.f32 %v68, 1.0614054
    %v71 = vadd.f32 %v69, -1.4531521
    %v72 = vadd.f32 %v70, -1.4531521
    %v73 = vmul.f32 %v71, %v67
    %v74 = vmul.f32 %v72, %v68
    %v75 = vadd.f32 %v73, 1.4214138
    %v76 = vadd.f32 %v74, 1.4214138
    %v77 = vmul.f32 %v75, %v67
    %v78 = vmul.f32 %v76, %v68
    %v79 = vadd.f32 %v77, -0.28449672
    %v80 = vadd.f32 %v78, -0.28449672
    %v81 = vmul.f32 %v79, %v67
    %v82 = vmul.f32 %v80, %v68
    %v83 = vadd.f32 %v81, 0.2548296
    %v84 = vadd.f32 %v82, 0.2548296
    %v85 = vmul.f32 %v83, %v67
    %v86 = vmul.f32 %v84, %v68
    %v87 = vsub.f32 0.0, %v55
    %v88 = vsub.f32 0.0, %v56
    %v89 = vmul.f32 %v87, %v55
    %v90 = vmul.f32 %v88, %v56
    %v91 = vmul.f32 %v89, 1.442695
    %v92 = vpow.pop %v91
    %v93 = vmul.f32 %v90, 1.442695
    %v94 = vpow.pop %v93
    %v95 = vmul.f32 %v85, %v92
    %v96 = vmul.f32 %v86, %v94
    %v97 = vsub.f32 1.0, %v95
    %v98 = vsub.f32 1.0, %v96
    %vm99 = vcmp.lt.f32.partialorder %v53, 0.0
    %vm100 = vcmp.lt.f32.partialorder %v54, 0.0
    %v101 = vsub.f32 0.0, %v97
    %v102 = vsub.f32 0.0, %v98
    %v103 = vsel %vm99, %v101, %v97
    %v104 = vsel %vm100, %v102, %v98
    %v105 = vadd.f32 %v103, 1.0
    %v106 = vadd.f32 %v104, 1.0
    %v107 = vmul.f32 %v51, %v105
    %v108 = vmul.f32 %v52, %v106
    %v111 = vrot.slane %v107, 7
    %v112 = vrot.slane %v108, 7
    %v115 = vrot.slane %v107, 6
    %v116 = vrot.slane %v108, 6
    %v119 = vrot.slane %v107, 5
    %v120 = vrot.slane %v108, 5
    %v123 = vrot.slane %v107, 4
    %v124 = vrot.slane %v108, 4
    %v127 = vrot.slane %v107, 3
    %v128 = vrot.slane %v108, 3
    %v131 = vrot.slane %v107, 2
    %v132 = vrot.slane %v108, 2
    %v135 = vrot.slane %v107, 1
    %v136 = vrot.slane %v108, 1
    %vm139 = vcmask 1040384
    %v140 = vsel %vm139, %v107, %v111
    %v141 = vsel %vm139, %v108, %v112
    %vm142 = vcmask 1041408
    %v143 = vsel %vm142, %v140, %v111
    %v144 = vsel %vm142, %v141, %v112
    %vm145 = vcmask 1042432
    %v146 = vsel %vm145, %v143, %v115
    %v147 = vsel %vm145, %v144, %v116
    %vm148 = vcmask 1043456
    %v149 = vsel %vm148, %v146, %v115
    %v150 = vsel %vm148, %v147, %v116
    %vm151 = vcmask 1044480
    %v152 = vsel %vm151, %v149, %v119
    %v153 = vsel %vm151, %v150, %v120
    %vm154 = vcmask 1045504
    %v155 = vsel %vm154, %v152, %v119
    %v156 = vsel %vm154, %v153, %v120
    %vm157 = vcmask 1046528
    %v158 = vsel %vm157, %v155, %v123
    %v159 = vsel %vm157, %v156, %v124
    %v160 = vsel %vm139, %v123, %v127
    %v161 = vsel %vm139, %v124, %v128
    %v162 = vsel %vm142, %v160, %v127
    %v163 = vsel %vm142, %v161, %v128
    %v164 = vsel %vm145, %v162, %v131
    %v165 = vsel %vm145, %v163, %v132
    %v166 = vsel %vm148, %v164, %v131
    %v167 = vsel %vm148, %v165, %v132
    %v168 = vsel %vm151, %v166, %v135
    %v169 = vsel %vm151, %v167, %v136
    %v170 = vsel %vm154, %v168, %v135
    %v171 = vsel %vm154, %v169, %v136
    %v172 = vsel %vm157, %v170, %v107
    %v173 = vsel %vm157, %v171, %v108
    %v174 = vld [vmem:[%s3] sm:$0xff]
    %v175 = vld [vmem:[%s3 + $0x8] sm:$0xff]
    %177 = vset.pattern.permute.xlu0 0
    %178 = vperm.xlu0 %177, %v174
    %v179 = vpop.permute.xlu0 %178
    %182 = vset.pattern.permute.xlu0 0
    %183 = vperm.xlu0 %182, %v175
    %v184 = vpop.permute.xlu0 %183
    %v186 = vmul.f32 %v179, %v158
    %v187 = vmul.f32 %v179, %v159
    %v188 = vmul.f32 %v184, %v172
    %v189 = vmul.f32 %v184, %v173
    %v190 = vld [vmem:[%s4] sm:$0xff]
    %v191 = vld [vmem:[%s4 + $0x8] sm:$0xff]
    %193 = vset.pattern.permute.xlu0 0
    %194 = vperm.xlu0 %193, %v190
    %v195 = vpop.permute.xlu0 %194
    %198 = vset.pattern.permute.xlu0 0
    %199 = vperm.xlu0 %198, %v191
    %v200 = vpop.permute.xlu0 %199
    %v202 = vadd.f32 %v186, %v195
    %v203 = vadd.f32 %v187, %v195
    %v204 = vadd.f32 %v188, %v200
    %v205 = vadd.f32 %v189, %v200
    %v206 = vmul.f32 %v202, 0.5
    %v207 = vmul.f32 %v203, 0.5
    %v208 = vmul.f32 %v204, 0.5
    %v209 = vmul.f32 %v205, 0.5
    %v210 = vmul.f32 %v202, 0.70710677
    %v211 = vmul.f32 %v203, 0.70710677
    %v212 = vmul.f32 %v204, 0.70710677
    %v213 = vmul.f32 %v205, 0.70710677
    %v214 = vand.u32 2147483647, %v210
    %v215 = vand.u32 2147483647, %v211
    %v216 = vand.u32 2147483647, %v212
    %v217 = vand.u32 2147483647, %v213
    %v218 = vmul.f32 %v214, 0.3275911
    %v219 = vmul.f32 %v215, 0.3275911
    %v220 = vmul.f32 %v216, 0.3275911
    %v221 = vmul.f32 %v217, 0.3275911
    %v222 = vadd.f32 %v218, 1.0
    %v223 = vadd.f32 %v219, 1.0
    %v224 = vadd.f32 %v220, 1.0
    %v225 = vadd.f32 %v221, 1.0
    %v226 = vrcp.pop %v222
    %v227 = vrcp.pop %v223
    %v228 = vrcp.pop %v224
    %v229 = vrcp.pop %v225
    %v230 = vmul.f32 %v222, %v226
    %v231 = vmul.f32 %v223, %v227
    %v232 = vmul.f32 %v224, %v228
    %v233 = vmul.f32 %v225, %v229
    %v234 = vsub.f32 2.0, %v230
    %v235 = vsub.f32 2.0, %v231
    %v236 = vsub.f32 2.0, %v232
    %v237 = vsub.f32 2.0, %v233
    %v238 = vmul.f32 %v226, %v234
    %v239 = vmul.f32 %v227, %v235
    %v240 = vmul.f32 %v228, %v236
    %v241 = vmul.f32 %v229, %v237
    %v242 = vmul.f32 %v238, 1.0614054
    %v243 = vmul.f32 %v239, 1.0614054
    %v244 = vmul.f32 %v240, 1.0614054
    %v245 = vmul.f32 %v241, 1.0614054
    %v246 = vadd.f32 %v242, -1.4531521
    %v247 = vadd.f32 %v243, -1.4531521
    %v248 = vadd.f32 %v244, -1.4531521
    %v249 = vadd.f32 %v245, -1.4531521
    %v250 = vmul.f32 %v246, %v238
    %v251 = vmul.f32 %v247, %v239
    %v252 = vmul.f32 %v248, %v240
    %v253 = vmul.f32 %v249, %v241
    %v254 = vadd.f32 %v250, 1.4214138
    %v255 = vadd.f32 %v251, 1.4214138
    %v256 = vadd.f32 %v252, 1.4214138
    %v257 = vadd.f32 %v253, 1.4214138
    %v258 = vmul.f32 %v254, %v238
    %v259 = vmul.f32 %v255, %v239
    %v260 = vmul.f32 %v256, %v240
    %v261 = vmul.f32 %v257, %v241
    %v262 = vadd.f32 %v258, -0.28449672
    %v263 = vadd.f32 %v259, -0.28449672
    %v264 = vadd.f32 %v260, -0.28449672
    %v265 = vadd.f32 %v261, -0.28449672
    %v266 = vmul.f32 %v262, %v238
    %v267 = vmul.f32 %v263, %v239
    %v268 = vmul.f32 %v264, %v240
    %v269 = vmul.f32 %v265, %v241
    %v270 = vadd.f32 %v266, 0.2548296
    %v271 = vadd.f32 %v267, 0.2548296
    %v272 = vadd.f32 %v268, 0.2548296
    %v273 = vadd.f32 %v269, 0.2548296
    %v274 = vmul.f32 %v270, %v238
    %v275 = vmul.f32 %v271, %v239
    %v276 = vmul.f32 %v272, %v240
    %v277 = vmul.f32 %v273, %v241
    %v278 = vsub.f32 0.0, %v214
    %v279 = vsub.f32 0.0, %v215
    %v280 = vsub.f32 0.0, %v216
    %v281 = vsub.f32 0.0, %v217
    %v282 = vmul.f32 %v278, %v214
    %v283 = vmul.f32 %v279, %v215
    %v284 = vmul.f32 %v280, %v216
    %v285 = vmul.f32 %v281, %v217
    %v286 = vmul.f32 %v282, 1.442695
    %v287 = vpow.pop %v286
    %v288 = vmul.f32 %v283, 1.442695
    %v289 = vpow.pop %v288
    %v290 = vmul.f32 %v284, 1.442695
    %v291 = vpow.pop %v290
    %v292 = vmul.f32 %v285, 1.442695
    %v293 = vpow.pop %v292
    %v294 = vmul.f32 %v274, %v287
    %v295 = vmul.f32 %v275, %v289
    %v296 = vmul.f32 %v276, %v291
    %v297 = vmul.f32 %v277, %v293
    %v298 = vsub.f32 1.0, %v294
    %v299 = vsub.f32 1.0, %v295
    %v300 = vsub.f32 1.0, %v296
    %v301 = vsub.f32 1.0, %v297
    %vm302 = vcmp.lt.f32.partialorder %v210, 0.0
    %vm303 = vcmp.lt.f32.partialorder %v211, 0.0
    %vm304 = vcmp.lt.f32.partialorder %v212, 0.0
    %vm305 = vcmp.lt.f32.partialorder %v213, 0.0
    %v306 = vsub.f32 0.0, %v298
    %v307 = vsub.f32 0.0, %v299
    %v308 = vsub.f32 0.0, %v300
    %v309 = vsub.f32 0.0, %v301
    %v310 = vsel %vm302, %v306, %v298
    %v311 = vsel %vm303, %v307, %v299
    %v312 = vsel %vm304, %v308, %v300
    %v313 = vsel %vm305, %v309, %v301
    %v314 = vadd.f32 %v310, 1.0
    %v315 = vadd.f32 %v311, 1.0
    %v316 = vadd.f32 %v312, 1.0
    %v317 = vadd.f32 %v313, 1.0
    %v318 = vmul.f32 %v206, %v314
    %v319 = vmul.f32 %v207, %v315
    %v320 = vmul.f32 %v208, %v316
    %v321 = vmul.f32 %v209, %v317
    %v322 = vlaneseq
    %v323 = vand.u32 %v322, 127
    %v324 = vadd.s32 %v323, 128
    %vm325 = vcmp.lt.s32.totalorder %v323, 0
    %v326 = vsub.s32 0, %v323
    %v327 = vsel %vm325, %v326, %v323
    %v328 = vshrl.u32 %v327, 4
    %v329 = vand.u32 %v327, 15
    %v330 = vsub.s32 0, %v329
    %v331 = vsel %vm325, %v330, %v329
    %vm332 = vcmp.lt.s32.totalorder %v324, 0
    %v333 = vsub.s32 0, %v324
    %v334 = vsel %vm332, %v333, %v324
    %v335 = vshrl.u32 %v334, 4
    %v336 = vand.u32 %v334, 15
    %v337 = vsub.s32 0, %v336
    %v338 = vsel %vm332, %v337, %v336
    %vm339 = vcmp.ne.s32.totalorder %v331, 0
    %vm340 = vcmp.ne.s32.totalorder %v338, 0
    %vm341 = vcmp.lt.s32.totalorder %v331, 0
    %vm342 = vcmp.lt.s32.totalorder %v338, 0
    %vm343 = vmand %vm341, %vm339
    %vm344 = vmand %vm342, %vm340
    %v345 = vadd.s32 %v331, 16
    %v346 = vadd.s32 %v338, 16
    %v347 = vsel %vm343, %v345, %v331
    %v348 = vsel %vm344, %v346, %v338
    %vm349 = vcmp.gt.s32.totalorder %v347, 0
    %vm350 = vcmp.gt.s32.totalorder %v348, 0
    %vm351 = vcmp.lt.s32.totalorder %v347, 15
    %vm352 = vcmp.lt.s32.totalorder %v348, 15
    %vm353 = vcmp.ge.s32.totalorder %v323, 16
    %vm354 = vcmp.ge.s32.totalorder %v324, 16
    %vm355 = vcmp.lt.s32.totalorder %v323, 240
    %vm356 = vcmp.lt.s32.totalorder %v324, 240
    %v357 = vsel %vm349, 1, 0
    %v358 = vsel %vm350, 1, 0
    %v359 = vcvt.s32.f32 %v357
    %v360 = vcvt.s32.f32 %v358
    %v361 = vsel %vm351, 1, 0
    %v362 = vsel %vm352, 1, 0
    %v363 = vcvt.s32.f32 %v361
    %v364 = vcvt.s32.f32 %v362
    %v365 = vsel %vm353, 1, 0
    %v366 = vsel %vm354, 1, 0
    %v367 = vcvt.s32.f32 %v365
    %v368 = vcvt.s32.f32 %v366
    %v369 = vsel %vm355, 1, 0
    %v370 = vsel %vm356, 1, 0
    %v371 = vcvt.s32.f32 %v369
    %v372 = vcvt.s32.f32 %v370
    %373 = vrot.lane.b32.xlu0 %v107, 1
    %v374 = vpop.permute.xlu0 %373
    %375 = vrot.lane.b32.xlu0 %v108, 1
    %v376 = vpop.permute.xlu0 %375
    %vm377 = vcmp.lt.s32.totalorder %v323, 1
    %v378 = vsel %vm377, %v374, %v376
    %v379 = vsel %vm377, %v376, %v374
    %380 = vrot.lane.b32.xlu0 %v107, 127
    %v381 = vpop.permute.xlu0 %380
    %382 = vrot.lane.b32.xlu0 %v108, 127
    %v383 = vpop.permute.xlu0 %382
    %vm384 = vcmp.lt.s32.totalorder %v323, 127
    %v385 = vsel %vm384, %v381, %v383
    %v386 = vsel %vm384, %v383, %v381
    %vm387 = vcmp.eq.s32.totalorder %v357, 1
    %vm388 = vcmp.eq.s32.totalorder %v358, 1
    %v389 = vsel %vm387, %v379, -3.4e+38
    %v390 = vsel %vm388, %v378, -3.4e+38
    %vm391 = vcmp.eq.s32.totalorder %v361, 1
    %vm392 = vcmp.eq.s32.totalorder %v362, 1
    %v393 = vsel %vm391, %v385, -3.4e+38
    %v394 = vsel %vm392, %v386, -3.4e+38
    %v395 = vmax.f32 %v389, %v393
    %v396 = vmax.f32 %v390, %v394
    %v397 = vmax.f32 %v107, %v395
    %v398 = vmax.f32 %v108, %v396
    %v399 = vmul.f32 %v379, %v359
    %v400 = vmul.f32 %v378, %v360
    %v401 = vadd.f32 %v107, %v399
    %v402 = vadd.f32 %v108, %v400
    %v403 = vmul.f32 %v385, %v363
    %v404 = vmul.f32 %v386, %v364
    %v405 = vadd.f32 %v401, %v403
    %v406 = vadd.f32 %v402, %v404
    %407 = vrot.lane.b32.xlu0 %v397, 16
    %v408 = vpop.permute.xlu0 %407
    %409 = vrot.lane.b32.xlu0 %v398, 16
    %v410 = vpop.permute.xlu0 %409
    %vm411 = vcmp.lt.s32.totalorder %v323, 16
    %v412 = vsel %vm411, %v408, %v410
    %v413 = vsel %vm411, %v410, %v408
    %414 = vrot.lane.b32.xlu0 %v397, 112
    %v415 = vpop.permute.xlu0 %414
    %416 = vrot.lane.b32.xlu0 %v398, 112
    %v417 = vpop.permute.xlu0 %416
    %vm418 = vcmp.lt.s32.totalorder %v323, 112
    %v419 = vsel %vm418, %v415, %v417
    %v420 = vsel %vm418, %v417, %v415
    %vm421 = vcmp.eq.s32.totalorder %v365, 1
    %vm422 = vcmp.eq.s32.totalorder %v366, 1
    %v423 = vsel %vm421, %v413, -3.4e+38
    %v424 = vsel %vm422, %v412, -3.4e+38
    %vm425 = vcmp.eq.s32.totalorder %v369, 1
    %vm426 = vcmp.eq.s32.totalorder %v370, 1
    %v427 = vsel %vm425, %v419, -3.4e+38
    %v428 = vsel %vm426, %v420, -3.4e+38
    %v429 = vmax.f32 %v423, %v427
    %v430 = vmax.f32 %v424, %v428
    %v431 = vmax.f32 %v397, %v429
    %v432 = vmax.f32 %v398, %v430
    %433 = vrot.lane.b32.xlu0 %v405, 16
    %v434 = vpop.permute.xlu0 %433
    %435 = vrot.lane.b32.xlu0 %v406, 16
    %v436 = vpop.permute.xlu0 %435
    %v437 = vsel %vm411, %v434, %v436
    %v438 = vsel %vm411, %v436, %v434
    %439 = vrot.lane.b32.xlu0 %v405, 112
    %v440 = vpop.permute.xlu0 %439
    %441 = vrot.lane.b32.xlu0 %v406, 112
    %v442 = vpop.permute.xlu0 %441
    %v443 = vsel %vm418, %v440, %v442
    %v444 = vsel %vm418, %v442, %v440
    %v445 = vmul.f32 %v438, %v367
    %v446 = vmul.f32 %v437, %v368
    %v447 = vadd.f32 %v405, %v445
    %v448 = vadd.f32 %v406, %v446
    %v449 = vmul.f32 %v443, %v371
    %v450 = vmul.f32 %v444, %v372
    %v451 = vadd.f32 %v447, %v449
    %v452 = vadd.f32 %v448, %v450
    %v453 = vmul.f32 %v451, 0.11111111
    %v454 = vmul.f32 %v452, 0.11111111
    %v455 = vld [vmem:[%s5] sm:$0xff]
    %457 = vset.pattern.permute.xlu0 0
    %458 = vperm.xlu0 %457, %v455
    %v459 = vpop.permute.xlu0 %458
    %v461 = vmul.f32 %v459, %v431
    %v462 = vmul.f32 %v459, %v432
    %v463 = vld [vmem:[%s6] sm:$0xff]
    %465 = vset.pattern.permute.xlu0 0
    %466 = vperm.xlu0 %465, %v463
    %v467 = vpop.permute.xlu0 %466
    %v469 = vadd.f32 %v461, %v467
    %v470 = vadd.f32 %v462, %v467
    %v471 = vmul.f32 %v469, 0.5
    %v472 = vmul.f32 %v470, 0.5
    %v473 = vmul.f32 %v469, 0.70710677
    %v474 = vmul.f32 %v470, 0.70710677
    %v475 = vand.u32 2147483647, %v473
    %v476 = vand.u32 2147483647, %v474
    %v477 = vmul.f32 %v475, 0.3275911
    %v478 = vmul.f32 %v476, 0.3275911
    %v479 = vadd.f32 %v477, 1.0
    %v480 = vadd.f32 %v478, 1.0
    %v481 = vrcp.pop %v479
    %v482 = vrcp.pop %v480
    %v483 = vmul.f32 %v479, %v481
    %v484 = vmul.f32 %v480, %v482
    %v485 = vsub.f32 2.0, %v483
    %v486 = vsub.f32 2.0, %v484
    %v487 = vmul.f32 %v481, %v485
    %v488 = vmul.f32 %v482, %v486
    %v489 = vmul.f32 %v487, 1.0614054
    %v490 = vmul.f32 %v488, 1.0614054
    %v491 = vadd.f32 %v489, -1.4531521
    %v492 = vadd.f32 %v490, -1.4531521
    %v493 = vmul.f32 %v491, %v487
    %v494 = vmul.f32 %v492, %v488
    %v495 = vadd.f32 %v493, 1.4214138
    %v496 = vadd.f32 %v494, 1.4214138
    %v497 = vmul.f32 %v495, %v487
    %v498 = vmul.f32 %v496, %v488
    %v499 = vadd.f32 %v497, -0.28449672
    %v500 = vadd.f32 %v498, -0.28449672
    %v501 = vmul.f32 %v499, %v487
    %v502 = vmul.f32 %v500, %v488
    %v503 = vadd.f32 %v501, 0.2548296
    %v504 = vadd.f32 %v502, 0.2548296
    %v505 = vmul.f32 %v503, %v487
    %v506 = vmul.f32 %v504, %v488
    %v507 = vsub.f32 0.0, %v475
    %v508 = vsub.f32 0.0, %v476
    %v509 = vmul.f32 %v507, %v475
    %v510 = vmul.f32 %v508, %v476
    %v511 = vmul.f32 %v509, 1.442695
    %v512 = vpow.pop %v511
    %v513 = vmul.f32 %v510, 1.442695
    %v514 = vpow.pop %v513
    %v515 = vmul.f32 %v505, %v512
    %v516 = vmul.f32 %v506, %v514
    %v517 = vsub.f32 1.0, %v515
    %v518 = vsub.f32 1.0, %v516
    %vm519 = vcmp.lt.f32.partialorder %v473, 0.0
    %vm520 = vcmp.lt.f32.partialorder %v474, 0.0
    %v521 = vsub.f32 0.0, %v517
    %v522 = vsub.f32 0.0, %v518
    %v523 = vsel %vm519, %v521, %v517
    %v524 = vsel %vm520, %v522, %v518
    %v525 = vadd.f32 %v523, 1.0
    %v526 = vadd.f32 %v524, 1.0
    %v527 = vmul.f32 %v471, %v525
    %v528 = vmul.f32 %v472, %v526
    %v529 = vld [vmem:[%s7] sm:$0xff]
    %531 = vset.pattern.permute.xlu0 0
    %532 = vperm.xlu0 %531, %v529
    %v533 = vpop.permute.xlu0 %532
    %v535 = vmul.f32 %v533, %v453
    %v536 = vmul.f32 %v533, %v454
    %v537 = vld [vmem:[%s8] sm:$0xff]
    %539 = vset.pattern.permute.xlu0 0
    %540 = vperm.xlu0 %539, %v537
    %v541 = vpop.permute.xlu0 %540
    %v543 = vadd.f32 %v535, %v541
    %v544 = vadd.f32 %v536, %v541
    %v545 = vmul.f32 %v543, 0.5
    %v546 = vmul.f32 %v544, 0.5
    %v547 = vmul.f32 %v543, 0.70710677
    %v548 = vmul.f32 %v544, 0.70710677
    %v549 = vand.u32 2147483647, %v547
    %v550 = vand.u32 2147483647, %v548
    %v551 = vmul.f32 %v549, 0.3275911
    %v552 = vmul.f32 %v550, 0.3275911
    %v553 = vadd.f32 %v551, 1.0
    %v554 = vadd.f32 %v552, 1.0
    %v555 = vrcp.pop %v553
    %v556 = vrcp.pop %v554
    %v557 = vmul.f32 %v553, %v555
    %v558 = vmul.f32 %v554, %v556
    %v559 = vsub.f32 2.0, %v557
    %v560 = vsub.f32 2.0, %v558
    %v561 = vmul.f32 %v555, %v559
    %v562 = vmul.f32 %v556, %v560
    %v563 = vmul.f32 %v561, 1.0614054
    %v564 = vmul.f32 %v562, 1.0614054
    %v565 = vadd.f32 %v563, -1.4531521
    %v566 = vadd.f32 %v564, -1.4531521
    %v567 = vmul.f32 %v565, %v561
    %v568 = vmul.f32 %v566, %v562
    %v569 = vadd.f32 %v567, 1.4214138
    %v570 = vadd.f32 %v568, 1.4214138
    %v571 = vmul.f32 %v569, %v561
    %v572 = vmul.f32 %v570, %v562
    %v573 = vadd.f32 %v571, -0.28449672
    %v574 = vadd.f32 %v572, -0.28449672
    %v575 = vmul.f32 %v573, %v561
    %v576 = vmul.f32 %v574, %v562
    %v577 = vadd.f32 %v575, 0.2548296
    %v578 = vadd.f32 %v576, 0.2548296
    %v579 = vmul.f32 %v577, %v561
    %v580 = vmul.f32 %v578, %v562
    %v581 = vsub.f32 0.0, %v549
    %v582 = vsub.f32 0.0, %v550
    %v583 = vmul.f32 %v581, %v549
    %v584 = vmul.f32 %v582, %v550
    %v585 = vmul.f32 %v583, 1.442695
    %v586 = vpow.pop %v585
    %v587 = vmul.f32 %v584, 1.442695
    %v588 = vpow.pop %v587
    %v589 = vmul.f32 %v579, %v586
    %v590 = vmul.f32 %v580, %v588
    %v591 = vsub.f32 1.0, %v589
    %v592 = vsub.f32 1.0, %v590
    %vm593 = vcmp.lt.f32.partialorder %v547, 0.0
    %vm594 = vcmp.lt.f32.partialorder %v548, 0.0
    %v595 = vsub.f32 0.0, %v591
    %v596 = vsub.f32 0.0, %v592
    %v597 = vsel %vm593, %v595, %v591
    %v598 = vsel %vm594, %v596, %v592
    %v599 = vadd.f32 %v597, 1.0
    %v600 = vadd.f32 %v598, 1.0
    %v601 = vmul.f32 %v545, %v599
    %v602 = vmul.f32 %v546, %v600
    %v603 = vmax.f32 %v527, %v528
    %604 = vmax.xlane.f32.xlu0 %v603
    %v605 = vpop.xlane.xlu0 %604
    %v606 = vsub.f32 %v527, %v605
    %v607 = vsub.f32 %v528, %v605
    %v608 = vmul.f32 %v606, 1.442695
    %v609 = vpow.pop %v608
    %v610 = vmul.f32 %v607, 1.442695
    %v611 = vpow.pop %v610
    %v612 = vadd.f32 %v609, %v611
    %613 = vadd.xlane.f32.xlu0 %v612
    %v614 = vpop.xlane.xlu0 %613
    %v615 = vrcp.pop %v614
    %v616 = vmul.f32 %v614, %v615
    %v617 = vsub.f32 2.0, %v616
    %v618 = vmul.f32 %v615, %v617
    %v619 = vmul.f32 %v609, %v618
    %v620 = vmul.f32 %v611, %v618
    %v621 = vmax.f32 %v601, %v602
    %622 = vmax.xlane.f32.xlu0 %v621
    %v623 = vpop.xlane.xlu0 %622
    %v624 = vsub.f32 %v601, %v623
    %v625 = vsub.f32 %v602, %v623
    %v626 = vmul.f32 %v624, 1.442695
    %v627 = vpow.pop %v626
    %v628 = vmul.f32 %v625, 1.442695
    %v629 = vpow.pop %v628
    %v630 = vadd.f32 %v627, %v629
    %631 = vadd.xlane.f32.xlu0 %v630
    %v632 = vpop.xlane.xlu0 %631
    %v633 = vrcp.pop %v632
    %v634 = vmul.f32 %v632, %v633
    %v635 = vsub.f32 2.0, %v634
    %v636 = vmul.f32 %v633, %v635
    %v637 = vmul.f32 %v627, %v636
    %v638 = vmul.f32 %v629, %v636
    %v639 = vadd.f32 %v619, 1.0
    %v640 = vadd.f32 %v620, 1.0
    %v641 = vmul.f32 %v318, %v639
    %v642 = vmul.f32 %v319, %v640
    %643 = vst [vmem:[#allocation2] sm:$0xf] %v641
    %644 = vst [vmem:[#allocation2 + $0x8] sm:$0xf] %v642
    %v645 = vadd.f32 %v637, 1.0
    %v646 = vadd.f32 %v638, 1.0
    %v649 = vrot.slane %v645, 4
    %v650 = vrot.slane %v646, 4
    %v653 = vmul.f32 %v318, %v649
    %v654 = vmul.f32 %v319, %v650
    %655 = vst [vmem:[#allocation2] sm:$0xf0] %v653
    %656 = vst [vmem:[#allocation2 + $0x8] sm:$0xf0] %v654
    %v659 = vrot.slane %v639, 4
    %v660 = vrot.slane %v640, 4
    %v663 = vmul.f32 %v320, %v659
    %v664 = vmul.f32 %v321, %v660
    %665 = vst [vmem:[#allocation2 + $0x10] sm:$0xf] %v663
    %666 = vst [vmem:[#allocation2 + $0x18] sm:$0xf] %v664
    %v667 = vmul.f32 %v320, %v645
    %v668 = vmul.f32 %v321, %v646
    %669 = vst [vmem:[#allocation2 + $0x10] sm:$0xf0] %v667
    %670 = vst [vmem:[#allocation2 + $0x18] sm:$0xf0] %v668
    // Predicated region
    $region38: #{tpu_custom_call.1} parent=1 // pred_check
      _
    $region39: #{tpu_custom_call.1} parent=1 // pred_check_branch
      %672 = sbr.rel (0) target = $region41
    $region40: #{tpu_custom_call.1} parent=1 // pred_region
      %s674 = ssub.s32 512, 512
      %675 = vsyncadd [#allocation3], %s674
      %s676 = sshll.u32 [#allocation2], 4
      %s677 = int_to_ptr.vmem [resolvable:$true] %s676
      %682 = dma.vmem_to_hbm [thread:$0]  %s677, 512, %s9, [#allocation3], 256, 256, 16
    $region41: #{tpu_custom_call.1} parent=1 // pred_fallthru
      _
    // Predicated region
    $region42: #{tpu_custom_call.1} parent=1 // pred_check
      _
    $region43: #{tpu_custom_call.1} parent=1 // pred_check_branch
      %684 = sbr.rel (0) target = $region45
    $region44: #{tpu_custom_call.1} parent=1 // pred_region
      %685 = dma.done [#allocation3], 512
    $region45: #{tpu_custom_call.1} parent=1 // pred_fallthru
      _
    %686 = vsyncpa [#allocation3], 1

</llo_original>
